<compile_context>
chip_gen: v6e
topology: v6e:2x2x1
jax: 0.10.0
libtpu: 0.0.40
codegen_flags: <defaults>
</compile_context>

<pallas_src>
import jax
import jax.numpy as jnp
from jax.experimental import pallas as pl
from jax.experimental.pallas import tpu as pltpu


_VPU_LAYER1_MAX_S = 16  # state_dim at/below this: layer 1 on the VPU (no MXU)


def _round_up(n, m):
    return ((n + m - 1) // m) * m


def _use_mxu_layer1(state_dim):
    return state_dim > _VPU_LAYER1_MAX_S


def _make_value_net_kernel(use_mxu_layer1, state_dim):
    def kernel(x_ref, w1_ref, b1_ref, w2_ref, b2_ref, out_ref):
        # x_ref : (TB, S)   state tile (bf16 on the MXU path, f32 on VPU path)
        # w1_ref: (S, Hp)   layer-1 weights, pre-transposed, lane-padded
        # b1_ref: (1, Hp)   layer-1 bias (f32, lane-padded)
        # w2_ref: (1, Hp)   layer-2 weights as a lane row (f32, lane-padded)
        # b2_ref: (1, 1)    scalar bias in SMEM
        # out_ref: (TB, 1)  value column for this batch tile
        if use_mxu_layer1:
            # Single-pass bf16 MXU matmul, f32 accumulation.
            h = jnp.dot(x_ref[...], w1_ref[...],
                        preferred_element_type=jnp.float32)        # (TB, Hp)
        else:
            # K is tiny: layer 1 as S unrolled broadcast-MACs on the VPU
            # (exact f32, MXU / extended slot stays idle).
            x = x_ref[...]                                          # (TB, S)
            w1 = w1_ref[...]                                        # (S, Hp)
            h = x[:, 0:1] * w1[0:1, :]
            for k in range(1, state_dim):
                h = h + x[:, k:k + 1] * w1[k:k + 1, :]              # (TB, Hp)
        h = jnp.maximum(h + b1_ref[...], 0.0)                       # ReLU, f32 VPU
        # Layer 2: VPU multiply + XLU lane reduction (no h.T, no M=1 matmul).
        v = jnp.sum(h * w2_ref[...], axis=1, keepdims=True)         # (TB, 1)
        out_ref[...] = v + b2_ref[0, 0]
    return kernel


def _choose_batch_tile(B, block_b):
    """Sublane-aligned tiles for tiny batches; 128-aligned and >= 2 tiles for
    large batches (so both v7x TensorCores get work via the 'parallel' axis)."""
    if B <= block_b:
        if B <= 1024:
            return _round_up(B, 8)                  # single small tile
        return _round_up(pl.cdiv(B, 2), 128)        # exactly 2 lane-aligned tiles
    return _round_up(block_b, 128)


def value_net_forward(state, packed_params, *, block_b=8192,
                      vmem_limit_bytes=48 * 1024 * 1024):
    """state: (B, state_dim) f32. packed_params from pack_params().
    Returns (B, 1) f32."""
    w1_k, b1_k, w2_k, b2_k = packed_params
    B, S = state.shape
    Hp = w1_k.shape[1]
    use_mxu = _use_mxu_layer1(S)
    if use_mxu:
        state = state.astype(jnp.bfloat16)          # bf16-native MXU, 1/2 HBM

    tb = _choose_batch_tile(B, block_b)
    Bp = _round_up(B, tb)
    if Bp != B:
        # Padded rows compute relu(b1) @ w2 + b2; harmless, sliced off below.
        state = jnp.pad(state, ((0, Bp - B), (0, 0)))
    num_tiles = Bp // tb

    out = pl.pallas_call(
        _make_value_net_kernel(use_mxu, S),
        out_shape=jax.ShapeDtypeStruct((Bp, 1), jnp.float32),
        grid=(num_tiles,),
        in_specs=[
            # state: tiled along batch (K = S left unpadded; it maps to lanes
            # only inside the tile and is tiny anyway).
            pl.BlockSpec((tb, S), lambda i: (i, 0)),
            # Weights / biases resident across all batch tiles.
            pl.BlockSpec((S, Hp), lambda i: (0, 0)),
            pl.BlockSpec((1, Hp), lambda i: (0, 0)),
            pl.BlockSpec((1, Hp), lambda i: (0, 0)),
            # b2 as a scalar in SMEM (no lane-padded VMEM tile).
            pl.BlockSpec(memory_space=pltpu.MemorySpace.SMEM),
        ],
        out_specs=pl.BlockSpec((tb, 1), lambda i: (i, 0)),
        compiler_params=pltpu.CompilerParams(
            # "parallel" shards the batch tiles across v7x's 2 TensorCores.
            dimension_semantics=("parallel",),
            vmem_limit_bytes=vmem_limit_bytes,
        ),
    )(state, w1_k, b1_k, w2_k, b2_k)

    return out[:B]


def init_value_net_params(key, state_dim, hidden_dim):
    """PyTorch-layout params matching ValueNet.__init__:
    weights ~ N(0, 0.1); biases use nn.Linear default U(-1/sqrt(fan_in), +)."""
    k1, k2, k3, k4 = jax.random.split(key, 4)
    w1 = 0.1 * jax.random.normal(k1, (hidden_dim, state_dim), jnp.float32)
    w2 = 0.1 * jax.random.normal(k2, (1, hidden_dim), jnp.float32)
    bound1 = 1.0 / jnp.sqrt(jnp.float32(state_dim))
    bound2 = 1.0 / jnp.sqrt(jnp.float32(hidden_dim))
    b1 = jax.random.uniform(k3, (hidden_dim,), jnp.float32, -bound1, bound1)
    b2 = jax.random.uniform(k4, (1,), jnp.float32, -bound2, bound2)
    return w1, b1, w2, b2


def pack_params(w1, b1, w2, b2):
    """PyTorch layout -> kernel layout: transpose w1, zero-pad hidden to a
    multiple of 128 lanes, keep w2 as a lane row (f32, consumed on the VPU),
    b2 as (1,1) SMEM scalar.  w1 is cast to bf16 only when layer 1 runs on
    the MXU (state_dim > _VPU_LAYER1_MAX_S).  Numerically exact padding."""
    hidden_dim, state_dim = w1.shape
    hp = _round_up(hidden_dim, 128)
    pad = hp - hidden_dim
    w1_k = jnp.pad(jnp.transpose(w1), ((0, 0), (0, pad)))            # (S, Hp)
    if _use_mxu_layer1(state_dim):
        w1_k = w1_k.astype(jnp.bfloat16)
    b1_k = jnp.pad(b1, (0, pad)).reshape(1, hp).astype(jnp.float32)  # (1, Hp)
    w2_k = jnp.pad(w2, ((0, 0), (0, pad))).astype(jnp.float32)       # (1, Hp)
    b2_k = b2.reshape(1, 1).astype(jnp.float32)                      # (1, 1)
    return w1_k, b1_k, w2_k, b2_k


def value_net_reference(state, w1, b1, w2, b2, *, layer1_dtype=jnp.float32):
    """Precision-controlled reference: layer-1 contraction at HIGHEST precision
    on inputs (optionally) rounded to layer1_dtype; layer 2 exact f32."""
    x = state.astype(layer1_dtype).astype(jnp.float32)
    w = w1.astype(layer1_dtype).astype(jnp.float32)
    h = jnp.einsum("bs,hs->bh", x, w, precision=jax.lax.Precision.HIGHEST)
    h = jnp.maximum(h + b1, 0.0)
    return jnp.sum(h * w2, axis=1, keepdims=True) + b2


if __name__ == "__main__":
    key = jax.random.PRNGKey(0)
    k_state, k_params, k_state2, k_state3, k_params3 = jax.random.split(key, 5)

    # Small shapes consistent with the module (e.g. CartPole: state_dim=4).
    batch, state_dim, hidden_dim = 8, 4, 32
    state = jax.random.normal(k_state, (batch, state_dim), jnp.float32)
    w1, b1, w2, b2 = init_value_net_params(k_params, state_dim, hidden_dim)
    packed = pack_params(w1, b1, w2, b2)

    out = jax.block_until_ready(value_net_forward(state, packed))
    ref = value_net_reference(state, w1, b1, w2, b2)
    assert out.shape == (batch, 1), out.shape
    assert jnp.allclose(out, ref, atol=1e-4, rtol=1e-4), (out, ref)

    # Multi-tile + ragged-batch padding path (3 lane-aligned tiles of 128).
    batch2 = 300
    state2 = jax.random.normal(k_state2, (batch2, state_dim), jnp.float32)
    out2 = jax.block_until_ready(value_net_forward(state2, packed, block_b=128))
    ref2 = value_net_reference(state2, w1, b1, w2, b2)
    assert out2.shape == (batch2, 1), out2.shape
    assert jnp.allclose(out2, ref2, atol=1e-4, rtol=1e-4)

    # Larger state_dim -> single-pass bf16 MXU layer-1 path.
    batch3, state_dim3, hidden_dim3 = 300, 64, 200
    state3 = jax.random.normal(k_state3, (batch3, state_dim3), jnp.float32)
    p3 = init_value_net_params(k_params3, state_dim3, hidden_dim3)
    packed3 = pack_params(*p3)
    out3 = jax.block_until_ready(value_net_forward(state3, packed3, block_b=128))
    ref3 = value_net_reference(state3, *p3, layer1_dtype=jnp.bfloat16)
    assert out3.shape == (batch3, 1), out3.shape
    assert jnp.allclose(out3, ref3, atol=1e-3, rtol=1e-3)

    print("KERNEL_OK")
</pallas_src>

<mosaic_0001>
module attributes {stable_mosaic.version = 11 : i64} {
  func.func @kernel(%arg0: i32, %arg1: memref<8x4xf32, #tpu.memory_space<vmem>>, %arg2: memref<4x128xf32, #tpu.memory_space<vmem>>, %arg3: memref<1x128xf32, #tpu.memory_space<vmem>>, %arg4: memref<1x128xf32, #tpu.memory_space<vmem>>, %arg5: memref<1x1xf32, #tpu.memory_space<smem>>, %arg6: memref<8x1xf32, #tpu.memory_space<vmem>>) attributes {dimension_semantics = [#tpu.dimension_semantics<parallel>], iteration_bounds = array<i64: 1>, scalar_prefetch = 0 : i64, scratch_operands = 0 : i64, tpu.core_type = #tpu.core_type<tc>, window_params = [{transform_indices = @transform_0, window_bounds = array<i64: 8, 4>}, {pipeline_mode = #tpu.pipeline_mode<synchronous>, transform_indices = @transform_1, window_bounds = array<i64: 4, 128>}, {pipeline_mode = #tpu.pipeline_mode<synchronous>, transform_indices = @transform_2, window_bounds = array<i64: 1, 128>}, {pipeline_mode = #tpu.pipeline_mode<synchronous>, transform_indices = @transform_3, window_bounds = array<i64: 1, 128>}, {transform_indices = @transform_4, window_bounds = array<i64: 1, 1>}, {transform_indices = @transform_5, window_bounds = array<i64: 8, 1>}]} {
    %c0 = arith.constant 0 : index
    %c0_0 = arith.constant 0 : index
    %0 = vector.load %arg1[%c0, %c0_0] : memref<8x4xf32, #tpu.memory_space<vmem>>, vector<8x4xf32>
    %c0_1 = arith.constant 0 : index
    %c0_2 = arith.constant 0 : index
    %1 = vector.load %arg2[%c0_1, %c0_2] : memref<4x128xf32, #tpu.memory_space<vmem>>, vector<4x128xf32>
    %2 = vector.extract_strided_slice %0 {offsets = [0, 0], sizes = [8, 1], strides = [1, 1]} : vector<8x4xf32> to vector<8x1xf32>
    %3 = vector.extract_strided_slice %1 {offsets = [0, 0], sizes = [1, 128], strides = [1, 1]} : vector<4x128xf32> to vector<1x128xf32>
    %4 = vector.broadcast %2 : vector<8x1xf32> to vector<8x128xf32>
    %5 = vector.broadcast %3 : vector<1x128xf32> to vector<8x128xf32>
    %6 = arith.mulf %4, %5 : vector<8x128xf32>
    %7 = vector.extract_strided_slice %0 {offsets = [0, 1], sizes = [8, 1], strides = [1, 1]} : vector<8x4xf32> to vector<8x1xf32>
    %8 = vector.extract_strided_slice %1 {offsets = [1, 0], sizes = [1, 128], strides = [1, 1]} : vector<4x128xf32> to vector<1x128xf32>
    %9 = vector.broadcast %7 : vector<8x1xf32> to vector<8x128xf32>
    %10 = vector.broadcast %8 : vector<1x128xf32> to vector<8x128xf32>
    %11 = arith.mulf %9, %10 : vector<8x128xf32>
    %12 = arith.addf %6, %11 : vector<8x128xf32>
    %13 = vector.extract_strided_slice %0 {offsets = [0, 2], sizes = [8, 1], strides = [1, 1]} : vector<8x4xf32> to vector<8x1xf32>
    %14 = vector.extract_strided_slice %1 {offsets = [2, 0], sizes = [1, 128], strides = [1, 1]} : vector<4x128xf32> to vector<1x128xf32>
    %15 = vector.broadcast %13 : vector<8x1xf32> to vector<8x128xf32>
    %16 = vector.broadcast %14 : vector<1x128xf32> to vector<8x128xf32>
    %17 = arith.mulf %15, %16 : vector<8x128xf32>
    %18 = arith.addf %12, %17 : vector<8x128xf32>
    %19 = vector.extract_strided_slice %0 {offsets = [0, 3], sizes = [8, 1], strides = [1, 1]} : vector<8x4xf32> to vector<8x1xf32>
    %20 = vector.extract_strided_slice %1 {offsets = [3, 0], sizes = [1, 128], strides = [1, 1]} : vector<4x128xf32> to vector<1x128xf32>
    %21 = vector.broadcast %19 : vector<8x1xf32> to vector<8x128xf32>
    %22 = vector.broadcast %20 : vector<1x128xf32> to vector<8x128xf32>
    %23 = arith.mulf %21, %22 : vector<8x128xf32>
    %24 = arith.addf %18, %23 : vector<8x128xf32>
    %c0_3 = arith.constant 0 : index
    %c0_4 = arith.constant 0 : index
    %25 = vector.load %arg3[%c0_3, %c0_4] : memref<1x128xf32, #tpu.memory_space<vmem>>, vector<1x128xf32>
    %26 = vector.broadcast %25 : vector<1x128xf32> to vector<8x128xf32>
    %27 = arith.addf %24, %26 : vector<8x128xf32>
    %cst = arith.constant 0.000000e+00 : f32
    %28 = vector.broadcast %cst : f32 to vector<8x128xf32>
    %29 = arith.maximumf %27, %28 : vector<8x128xf32>
    %c0_5 = arith.constant 0 : index
    %c0_6 = arith.constant 0 : index
    %30 = vector.load %arg4[%c0_5, %c0_6] : memref<1x128xf32, #tpu.memory_space<vmem>>, vector<1x128xf32>
    %31 = vector.broadcast %30 : vector<1x128xf32> to vector<8x128xf32>
    %32 = arith.mulf %29, %31 : vector<8x128xf32>
    %cst_7 = arith.constant dense<0.000000e+00> : vector<8xf32>
    %33 = vector.multi_reduction <add>, %32, %cst_7 [1] : vector<8x128xf32> to vector<8xf32>
    %34 = vector.shape_cast %33 : vector<8xf32> to vector<8x1xf32>
    %c0_8 = arith.constant 0 : index
    %c0_9 = arith.constant 0 : index
    %35 = memref.load %arg5[%c0_8, %c0_9] : memref<1x1xf32, #tpu.memory_space<smem>>
    %36 = vector.broadcast %35 : f32 to vector<8x1xf32>
    %37 = arith.addf %34, %36 : vector<8x1xf32>
    %c0_10 = arith.constant 0 : index
    %c0_11 = arith.constant 0 : index
    %38 = vector.load %arg6[%c0_10, %c0_11] : memref<8x1xf32, #tpu.memory_space<vmem>>, vector<8x1xf32>
    tpu.vector_store %arg6[%c0_10, %c0_11], %37 {strides = array<i32>} : memref<8x1xf32, #tpu.memory_space<vmem>>, vector<8x1xf32>,
    return
  }
  func.func @transform_0(%arg0: i32) -> (i32, i32) {
    %c0_i32 = arith.constant 0 : i32
    %c0_i32_0 = arith.constant 0 : i32
    return %arg0, %c0_i32 : i32, i32
  }
  func.func @transform_1(%arg0: i32) -> (i32, i32) {
    %c0_i32 = arith.constant 0 : i32
    %c0_i32_0 = arith.constant 0 : i32
    %c0_i32_1 = arith.constant 0 : i32
    return %c0_i32, %c0_i32_0 : i32, i32
  }
  func.func @transform_2(%arg0: i32) -> (i32, i32) {
    %c0_i32 = arith.constant 0 : i32
    %c0_i32_0 = arith.constant 0 : i32
    %c0_i32_1 = arith.constant 0 : i32
    return %c0_i32, %c0_i32_0 : i32, i32
  }
  func.func @transform_3(%arg0: i32) -> (i32, i32) {
    %c0_i32 = arith.constant 0 : i32
    %c0_i32_0 = arith.constant 0 : i32
    %c0_i32_1 = arith.constant 0 : i32
    return %c0_i32, %c0_i32_0 : i32, i32
  }
  func.func @transform_4(%arg0: i32) -> (i32, i32) {
    %c0_i32 = arith.constant 0 : i32
    %c0_i32_0 = arith.constant 0 : i32
    %c0_i32_1 = arith.constant 0 : i32
    return %c0_i32, %c0_i32_0 : i32, i32
  }
  func.func @transform_5(%arg0: i32) -> (i32, i32) {
    %c0_i32 = arith.constant 0 : i32
    %c0_i32_0 = arith.constant 0 : i32
    return %arg0, %c0_i32 : i32, i32
  }
}

</mosaic_0001>

<llo_original>
// kernel: tpu_custom_call.1
$region0: #{tpu_custom_call.1}
  #allocation0 [shape = 'u32[]', space=smem, size = 0x4, offset = 0x4, fixed_abs, tag = 'smem constant byte address 0x4 - core index']
  #allocation1 [shape = 'u32[144,128]{1,0:T(1,128)}', space=vmem, size = 0x12000, scoped, tag = 'internal scratch']
  #allocation2 [shape = 'f32[1,1]{1,0:T(1,128)S(6)}', space=smem, size = 0x200, scoped, tag = 'scoped memory for tpu_custom_call.1']
  %s0 = inlined_call_operand.vmem [shape: f32[8,4], index: 0, kind: input, shape index: {}]
  %s1 = inlined_call_operand.vmem [shape: f32[4,128], index: 1, kind: input, shape index: {}]
  %s2 = inlined_call_operand.vmem [shape: f32[1,128], index: 2, kind: input, shape index: {}]
  %s3 = inlined_call_operand.vmem [shape: f32[1,128], index: 3, kind: input, shape index: {}]
  %s4 = inlined_call_operand.<no memory space> [shape: f32[1,1], index: 4, kind: input, shape index: {}]
  %s5 = inlined_call_operand.vmem [shape: f32[8,1], index: 5, kind: output, shape index: {}]
  %s6 = sld [smem:[#allocation0]]
  $region30: #{tpu_custom_call.1} parent=0
    _
  %s8 = ssub.s32 1, %s6
  %s9 = scalar_select 0, %s8, %s6
  %10 = sst [smem:[#allocation2]] %s4
  // Predicated region
  $region2: #{tpu_custom_call.1} parent=0 // pred_check
    _
  $region3: #{tpu_custom_call.1} parent=0 // pred_check_branch
    %12 = sbr.rel (0) target = $region5
  $region4: #{tpu_custom_call.1} parent=0 // pred_region
    _
  $region5: #{tpu_custom_call.1} parent=0 // pred_fallthru
    _
  // Predicated region
  $region6: #{tpu_custom_call.1} parent=0 // pred_check
    _
  $region7: #{tpu_custom_call.1} parent=0 // pred_check_branch
    %14 = sbr.rel (0) target = $region9
  $region8: #{tpu_custom_call.1} parent=0 // pred_region
    _
  $region9: #{tpu_custom_call.1} parent=0 // pred_fallthru
    _
  // Predicated region
  $region10: #{tpu_custom_call.1} parent=0 // pred_check
    _
  $region11: #{tpu_custom_call.1} parent=0 // pred_check_branch
    %16 = sbr.rel (0) target = $region13
  $region12: #{tpu_custom_call.1} parent=0 // pred_region
    _
  $region13: #{tpu_custom_call.1} parent=0 // pred_fallthru
    _
  // Predicated region
  $region14: #{tpu_custom_call.1} parent=0 // pred_check
    _
  $region15: #{tpu_custom_call.1} parent=0 // pred_check_branch
    %18 = sbr.rel (0) target = $region17
  $region16: #{tpu_custom_call.1} parent=0 // pred_region
    _
  $region17: #{tpu_custom_call.1} parent=0 // pred_fallthru
    _
  // Predicated region
  $region18: #{tpu_custom_call.1} parent=0 // pred_check
    _
  $region19: #{tpu_custom_call.1} parent=0 // pred_check_branch
    %20 = sbr.rel (0) target = $region21
  $region20: #{tpu_custom_call.1} parent=0 // pred_region
    _
  $region21: #{tpu_custom_call.1} parent=0 // pred_fallthru
    _
  %v21 = vld [vmem:[%s0] sm:$0xff]
  %v22 = vld [vmem:[%s1] sm:$0xf]
  %24 = vset.pattern.permute.xlu0 0
  %25 = vperm.xlu0 %24, %v21
  %v26 = vpop.permute.xlu0 %25
  %v28 = vlaneseq
  %v29 = vshrl.u32 %v28, 7
  %v30 = vsub.s32 0, %v29
  %v31 = vrot.slane %v22, %v30
  %v32 = vmul.f32 %v26, %v31
  %33 = vset.pattern.permute.xlu0 1
  %34 = vperm.xlu0 %33, %v21
  %v35 = vpop.permute.xlu0 %34
  %v37 = vlaneseq
  %v38 = vshrl.u32 %v37, 7
  %v39 = vsub.s32 1, %v38
  %v40 = vrot.slane %v22, %v39
  %v41 = vmul.f32 %v35, %v40
  %v42 = vadd.f32 %v32, %v41
  %43 = vset.pattern.permute.xlu0 2
  %44 = vperm.xlu0 %43, %v21
  %v45 = vpop.permute.xlu0 %44
  %v47 = vlaneseq
  %v48 = vshrl.u32 %v47, 7
  %v49 = vsub.s32 2, %v48
  %v50 = vrot.slane %v22, %v49
  %v51 = vmul.f32 %v45, %v50
  %v52 = vadd.f32 %v42, %v51
  %53 = vset.pattern.permute.xlu0 3
  %54 = vperm.xlu0 %53, %v21
  %v55 = vpop.permute.xlu0 %54
  %v57 = vlaneseq
  %v58 = vshrl.u32 %v57, 7
  %v59 = vsub.s32 3, %v58
  %v60 = vrot.slane %v22, %v59
  %v61 = vmul.f32 %v55, %v60
  %v62 = vadd.f32 %v52, %v61
  %v63 = vld [vmem:[%s2] sm:$0x1]
  %v65 = vlaneseq
  %v66 = vshrl.u32 %v65, 7
  %v67 = vsub.s32 0, %v66
  %v68 = vrot.slane %v63, %v67
  %v70 = vadd.f32 %v62, %v68
  %v71 = vmax.f32 %v70, 0.0
  %v72 = vld [vmem:[%s3] sm:$0x1]
  %v74 = vlaneseq
  %v75 = vshrl.u32 %v74, 7
  %v76 = vsub.s32 0, %v75
  %v77 = vrot.slane %v72, %v76
  %v79 = vmul.f32 %v71, %v77
  %80 = vadd.xlane.f32.xlu0 %v79
  %v81 = vpop.xlane.xlu0 %80
  %s82 = sld [smem:[#allocation2]]
  %v83 = vstv %s82
  %v84 = vadd.f32 %v81, %v83
  %vm85 = vcmask 7168
  %86 = vst.msk [vmem:[%s5] sm:$0xff] %vm85, %v84
  // Predicated region
  $region22: #{tpu_custom_call.1} parent=0 // pred_check
    _
  $region23: #{tpu_custom_call.1} parent=0 // pred_check_branch
    %88 = sbr.rel (0) target = $region25
  $region24: #{tpu_custom_call.1} parent=0 // pred_region
    _
  $region25: #{tpu_custom_call.1} parent=0 // pred_fallthru
    _
  // Predicated region
  $region26: #{tpu_custom_call.1} parent=0 // pred_check
    _
  $region27: #{tpu_custom_call.1} parent=0 // pred_check_branch
    %90 = sbr.rel (0) target = $region29
  $region28: #{tpu_custom_call.1} parent=0 // pred_region
    _
  $region29: #{tpu_custom_call.1} parent=0 // pred_fallthru
    _

</llo_original>
